<compile_context>
chip_gen: v7x
topology: tpu7x:2x2x1
jax: 0.10.0
libtpu: 0.0.40
codegen_flags: <defaults>
</compile_context>

<pallas_src>
import jax
import jax.numpy as jnp
from jax.experimental import pallas as pl
from jax.experimental.pallas import tpu as pltpu


# ----------------------------------------------------------------------------
# Kernels: tiled GEMM + fused bias epilogue, k-innermost reduction.
# ----------------------------------------------------------------------------
def _mm_bias_kernel(x_ref, w_ref, b_ref, o_ref):
    """f32 output: accumulate directly into o_ref (no scratch, no copy)."""
    k = pl.program_id(2)

    @pl.when(k == 0)
    def _init():
        o_ref[...] = jnp.zeros_like(o_ref)

    o_ref[...] += jnp.dot(x_ref[...], w_ref[...],
                          preferred_element_type=jnp.float32)

    @pl.when(k == pl.num_programs(2) - 1)
    def _bias():
        o_ref[...] += b_ref[...]          # (1, TN) broadcasts over (TM, TN)


def _mm_bias_kernel_acc(x_ref, w_ref, b_ref, o_ref, acc_ref):
    """Sub-f32 output dtypes: keep a separate f32 VMEM accumulator."""
    k = pl.program_id(2)

    @pl.when(k == 0)
    def _init():
        acc_ref[...] = jnp.zeros_like(acc_ref)

    acc_ref[...] += jnp.dot(x_ref[...], w_ref[...],
                            preferred_element_type=jnp.float32)

    @pl.when(k == pl.num_programs(2) - 1)
    def _store():
        o_ref[...] = (acc_ref[...] + b_ref[...]).astype(o_ref.dtype)


# ----------------------------------------------------------------------------
# Tiling helpers.
# ----------------------------------------------------------------------------
def _round_up(x, m):
    return (x + m - 1) // m * m


def _vmem_budget():
    """(vmem_limit_bytes, tile_working_set_budget) from the chip's VMEM size."""
    cap = 64 * 1024 * 1024  # conservative default: v7x per-TensorCore VMEM
    try:
        info = pltpu.get_tpu_info()
        cap = int(getattr(info, "vmem_capacity_bytes", cap)) or cap
    except Exception:
        pass
    vmem_limit = min(cap * 3 // 4, 100 * 1024 * 1024)   # 48 MiB v7x, 96 MiB v5e/v6e
    tile_budget = vmem_limit * 2 // 3                   # headroom for Mosaic scratch
    return int(vmem_limit), int(tile_budget)


def _pick_tile(dim, cap):
    """Pick a lane-dense tile (multiple of 128, <= cap) and the padded dim.

    Prefers a tile that exactly divides the 128-rounded dim; if that would
    collapse the tile below cap/2 (back into the step-overhead-bound regime),
    pads the dim up to a multiple of the cap instead of shrinking the tile.
    """
    cap = max(128, cap - cap % 128)
    dim128 = _round_up(dim, 128)
    if dim128 <= cap:
        return dim128, dim128
    t = cap
    while dim128 % t:
        t -= 128
    if 2 * t >= cap:
        return t, dim128
    return cap, _round_up(dim, cap)


# ----------------------------------------------------------------------------
# BasicConv2d.forward == Conv2d(padding=0, bias=True).
# ----------------------------------------------------------------------------
def basic_conv2d(x, weight_oihw, bias, *, stride,
                 compute_dtype=jnp.bfloat16, out_dtype=None,
                 data_format="NCHW"):
    """Conv2d with padding=0 and bias on NCHW (or NHWC) input."""
    if data_format == "NCHW":
        x_nhwc = jnp.transpose(x, (0, 2, 3, 1))
    else:
        x_nhwc = x
    n, h, w, cin = x_nhwc.shape
    cout, cin_w, kh, kw = weight_oihw.shape
    assert cin == cin_w
    sh, sw = (stride, stride) if isinstance(stride, int) else stride
    ho = (h - kh) // sh + 1
    wo = (w - kw) // sw + 1
    assert ho > 0 and wo > 0

    if compute_dtype is None:
        compute_dtype = x.dtype
    if out_dtype is None:
        out_dtype = x.dtype

    # --- im2col: fold (kh, kw, cin) into the GEMM contraction ---------------
    # Materialized directly in the (usually bf16) compute dtype so the
    # inflated buffer costs half the HBM traffic of an f32 one.
    x_nhwc = x_nhwc.astype(compute_dtype)
    patches = []
    for dh in range(kh):
        for dw in range(kw):
            patches.append(
                x_nhwc[:, dh:dh + (ho - 1) * sh + 1:sh,
                          dw:dw + (wo - 1) * sw + 1:sw, :])
    kk = kh * kw * cin
    mm = n * ho * wo
    xcol = jnp.concatenate(patches, axis=-1).reshape(mm, kk)

    # Weights (Cout, Cin, KH, KW) -> (KH, KW, Cin, Cout) -> (KH*KW*Cin, Cout).
    w2d = jnp.transpose(weight_oihw, (2, 3, 1, 0)).reshape(kk, cout)

    # --- generation-aware tile selection -------------------------------------
    vmem_limit, tile_budget = _vmem_budget()
    in_bytes = jnp.dtype(compute_dtype).itemsize
    out_bytes = jnp.dtype(out_dtype).itemsize
    use_acc_scratch = jnp.dtype(out_dtype) != jnp.dtype(jnp.float32)
    m_gran = 16 if in_bytes < 4 else 8      # bf16 packs 16 sublanes per vreg

    tn, cout_p = _pick_tile(cout, 1024)     # full Cout when it fits => xcol read once
    tk, k_p = _pick_tile(kk, 1024)
    tm = min(512, _round_up(mm, m_gran))
    # Megacore: if Cout is a single tile, keep >= 2 tiles along M so both
    # v7x TensorCores get work (when there is enough M to split).
    if cout_p // tn == 1 and mm > m_gran:
        tm = min(tm, _round_up((mm + 1) // 2, m_gran))

    def _working_set(tm_, tk_, tn_):
        ws = 2 * tm_ * tk_ * in_bytes        # xcol, double-buffered
        ws += 2 * tk_ * tn_ * in_bytes       # weights, double-buffered
        ws += 2 * tm_ * tn_ * out_bytes      # output, double-buffered
        ws += 2 * tn_ * 4                    # bias
        if use_acc_scratch:
            ws += tm_ * tn_ * 4              # f32 accumulator scratch
        return ws

    while _working_set(tm, tk, tn) > tile_budget:
        if tk >= tn and tk > 256:
            tk, k_p = _pick_tile(kk, tk // 2)
        elif tn > 256:
            tn, cout_p = _pick_tile(cout, tn // 2)
        elif tm > 2 * m_gran:
            tm = max(m_gran, _round_up(tm // 2, m_gran))
        else:
            break

    m_p = _round_up(mm, tm)

    # --- lane-dense zero padding ---------------------------------------------
    xcol_p = jnp.pad(xcol, ((0, m_p - mm), (0, k_p - kk)))
    w_p = jnp.pad(w2d.astype(compute_dtype),
                  ((0, k_p - kk), (0, cout_p - cout)))
    b_p = jnp.pad(bias.astype(jnp.float32).reshape(1, cout),
                  ((0, 0), (0, cout_p - cout)))

    grid = (m_p // tm, cout_p // tn, k_p // tk)

    in_specs = [
        pl.BlockSpec((tm, tk), lambda i, j, k: (i, k)),
        pl.BlockSpec((tk, tn), lambda i, j, k: (k, j)),
        pl.BlockSpec((1, tn), lambda i, j, k: (0, j)),
    ]
    out_spec = pl.BlockSpec((tm, tn), lambda i, j, k: (i, j))

    if use_acc_scratch:
        kernel = _mm_bias_kernel_acc
        scratch = [pltpu.VMEM((tm, tn), jnp.float32)]
        out_shape = jax.ShapeDtypeStruct((m_p, cout_p), out_dtype)
    else:
        kernel = _mm_bias_kernel
        scratch = []
        out_shape = jax.ShapeDtypeStruct((m_p, cout_p), jnp.float32)

    out_p = pl.pallas_call(
        kernel,
        out_shape=out_shape,
        grid_spec=pltpu.PrefetchScalarGridSpec(
            num_scalar_prefetch=0,
            grid=grid,
            in_specs=in_specs,
            out_specs=out_spec,
            scratch_shapes=scratch,
        ),
        compiler_params=pltpu.CompilerParams(
            dimension_semantics=("parallel", "parallel", "arbitrary"),
            vmem_limit_bytes=vmem_limit,
        ),
    )(xcol_p, w_p, b_p)

    out = out_p[:mm, :cout].astype(out_dtype).reshape(n, ho, wo, cout)
    if data_format == "NCHW":
        out = jnp.transpose(out, (0, 3, 1, 2))
    return out


# ----------------------------------------------------------------------------
# Self-test.
# ----------------------------------------------------------------------------
if __name__ == "__main__":
    # Small shapes consistent with the module: batch=2, in_channels=4,
    # spatial=16, out_channels=8, kernel_size=3, stride=1.
    N, CIN, H, W = 2, 4, 16, 16
    COUT, KSIZE, STRIDE = 8, 3, 1

    key = jax.random.PRNGKey(0)
    kx, kwt, kb = jax.random.split(key, 3)

    x = jax.random.normal(kx, (N, CIN, H, W), dtype=jnp.float32)
    fan_in = CIN * KSIZE * KSIZE
    bound = 1.0 / (fan_in ** 0.5)
    weight = jax.random.uniform(kwt, (COUT, CIN, KSIZE, KSIZE),
                                dtype=jnp.float32, minval=-bound, maxval=bound)
    bias = jax.random.uniform(kb, (COUT,), dtype=jnp.float32,
                              minval=-bound, maxval=bound)

    # Reference: XLA conv (NCHW/OIHW, padding=0) + bias, i.e. nn.Conv2d.
    ref = jax.lax.conv_general_dilated(
        x, weight, window_strides=(STRIDE, STRIDE), padding="VALID",
        dimension_numbers=("NCHW", "OIHW", "NCHW"),
    ) + bias.reshape(1, COUT, 1, 1)

    HO = (H - KSIZE) // STRIDE + 1
    WO = (W - KSIZE) // STRIDE + 1

    # Default fast path: bf16 MXU operands, f32 accumulation / output.
    out_bf16 = jax.block_until_ready(basic_conv2d(x, weight, bias, stride=STRIDE))
    assert out_bf16.shape == (N, COUT, HO, WO)
    assert jnp.allclose(out_bf16, ref, atol=3e-2, rtol=3e-2)

    # Full-f32 path: tight check of the im2col / GEMM / bias structure.
    out_f32 = jax.block_until_ready(
        basic_conv2d(x, weight, bias, stride=STRIDE, compute_dtype=jnp.float32))
    assert out_f32.shape == (N, COUT, HO, WO)
    assert jnp.allclose(out_f32, ref, atol=1e-4, rtol=1e-4)

    print("KERNEL_OK")
</pallas_src>

<mosaic_0001>
module attributes {stable_mosaic.version = 11 : i64} {
  func.func @_mm_bias_kernel(%arg0: i32, %arg1: i32, %arg2: i32, %arg3: memref<208x128xbf16, #tpu.memory_space<vmem>>, %arg4: memref<128x128xbf16, #tpu.memory_space<vmem>>, %arg5: memref<1x128xf32, #tpu.memory_space<vmem>>, %arg6: memref<208x128xf32, #tpu.memory_space<vmem>>) attributes {dimension_semantics = [#tpu.dimension_semantics<parallel>, #tpu.dimension_semantics<parallel>, #tpu.dimension_semantics<arbitrary>], iteration_bounds = array<i64: 2, 1, 1>, scalar_prefetch = 0 : i64, scratch_operands = 0 : i64, tpu.core_type = #tpu.core_type<tc>, window_params = [{transform_indices = @transform_0, window_bounds = array<i64: 208, 128>}, {transform_indices = @transform_1, window_bounds = array<i64: 128, 128>}, {transform_indices = @transform_2, window_bounds = array<i64: 1, 128>}, {transform_indices = @transform_3, window_bounds = array<i64: 208, 128>}]} {
    %c0_i32 = arith.constant 0 : i32
    %0 = arith.cmpi eq, %arg2, %c0_i32 : i32
    %1 = arith.extui %0 : i1 to i32
    %c0_i32_0 = arith.constant 0 : i32
    %2 = arith.cmpi ne, %1, %c0_i32_0 : i32
    scf.if %2 {
      %cst_10 = arith.constant 0.000000e+00 : f32
      %12 = vector.broadcast %cst_10 : f32 to vector<208x128xf32>
      %c0_11 = arith.constant 0 : index
      %c0_12 = arith.constant 0 : index
      %13 = vector.load %arg6[%c0_11, %c0_12] : memref<208x128xf32, #tpu.memory_space<vmem>>, vector<208x128xf32>
      tpu.vector_store %arg6[%c0_11, %c0_12], %12 {strides = array<i32>} : memref<208x128xf32, #tpu.memory_space<vmem>>, vector<208x128xf32>,
    } else {
    }
    %c0 = arith.constant 0 : index
    %c0_1 = arith.constant 0 : index
    %3 = vector.load %arg6[%c0, %c0_1] : memref<208x128xf32, #tpu.memory_space<vmem>>, vector<208x128xf32>
    %c0_2 = arith.constant 0 : index
    %c0_3 = arith.constant 0 : index
    %4 = vector.load %arg3[%c0_2, %c0_3] : memref<208x128xbf16, #tpu.memory_space<vmem>>, vector<208x128xbf16>
    %c0_4 = arith.constant 0 : index
    %c0_5 = arith.constant 0 : index
    %5 = vector.load %arg4[%c0_4, %c0_5] : memref<128x128xbf16, #tpu.memory_space<vmem>>, vector<128x128xbf16>
    %cst = arith.constant dense<0.000000e+00> : vector<208x128xf32>
    %6 = tpu.matmul %4, %5, %cst {dimension_numbers = #tpu.dot_dimension_numbers<[1], [0], [0], [1], [0, 0, 1, 1], [], []>} : vector<208x128xbf16>, vector<128x128xbf16>, vector<208x128xf32> -> vector<208x128xf32>
    %7 = arith.addf %3, %6 : vector<208x128xf32>
    %c0_6 = arith.constant 0 : index
    %c0_7 = arith.constant 0 : index
    %8 = vector.load %arg6[%c0_6, %c0_7] : memref<208x128xf32, #tpu.memory_space<vmem>>, vector<208x128xf32>
    tpu.vector_store %arg6[%c0_6, %c0_7], %7 {strides = array<i32>} : memref<208x128xf32, #tpu.memory_space<vmem>>, vector<208x128xf32>,
    %c0_i32_8 = arith.constant 0 : i32
    %9 = arith.cmpi eq, %arg2, %c0_i32_8 : i32
    %10 = arith.extui %9 : i1 to i32
    %c0_i32_9 = arith.constant 0 : i32
    %11 = arith.cmpi ne, %10, %c0_i32_9 : i32
    scf.if %11 {
      %c0_10 = arith.constant 0 : index
      %c0_11 = arith.constant 0 : index
      %12 = vector.load %arg6[%c0_10, %c0_11] : memref<208x128xf32, #tpu.memory_space<vmem>>, vector<208x128xf32>
      %c0_12 = arith.constant 0 : index
      %c0_13 = arith.constant 0 : index
      %13 = vector.load %arg5[%c0_12, %c0_13] : memref<1x128xf32, #tpu.memory_space<vmem>>, vector<1x128xf32>
      %14 = vector.broadcast %13 : vector<1x128xf32> to vector<208x128xf32>
      %15 = arith.addf %12, %14 : vector<208x128xf32>
      %c0_14 = arith.constant 0 : index
      %c0_15 = arith.constant 0 : index
      %16 = vector.load %arg6[%c0_14, %c0_15] : memref<208x128xf32, #tpu.memory_space<vmem>>, vector<208x128xf32>
      tpu.vector_store %arg6[%c0_14, %c0_15], %15 {strides = array<i32>} : memref<208x128xf32, #tpu.memory_space<vmem>>, vector<208x128xf32>,
    } else {
    }
    return
  }
  func.func @transform_0(%arg0: i32, %arg1: i32, %arg2: i32) -> (i32, i32) {
    %c0_i32 = arith.constant 0 : i32
    return %arg0, %arg2 : i32, i32
  }
  func.func @transform_1(%arg0: i32, %arg1: i32, %arg2: i32) -> (i32, i32) {
    %c0_i32 = arith.constant 0 : i32
    return %arg2, %arg1 : i32, i32
  }
  func.func @transform_2(%arg0: i32, %arg1: i32, %arg2: i32) -> (i32, i32) {
    %c0_i32 = arith.constant 0 : i32
    %c0_i32_0 = arith.constant 0 : i32
    return %c0_i32, %arg1 : i32, i32
  }
  func.func @transform_3(%arg0: i32, %arg1: i32, %arg2: i32) -> (i32, i32) {
    %c0_i32 = arith.constant 0 : i32
    return %arg0, %arg1 : i32, i32
  }
}

</mosaic_0001>

<llo_original>
// kernel: tpu_custom_call.1
$region0: #{tpu_custom_call.1}
  #allocation0 [shape = 'u32[]', space=smem, size = 0x4, offset = 0x4, fixed_abs, tag = 'smem constant byte address 0x4 - core index']
  #allocation1 [shape = 'u32[144,128]{1,0:T(1,128)}', space=vmem, size = 0x12000, scoped, tag = 'internal scratch']
  %s0 = inlined_call_operand.hbm [shape: bf16[416,128], index: 0, kind: input, shape index: {}]
  %s1 = inlined_call_operand.hbm [shape: bf16[128,128], index: 1, kind: input, shape index: {}]
  %s2 = inlined_call_operand.vmem [shape: f32[1,128], index: 2, kind: input, shape index: {}]
  %s3 = inlined_call_operand.hbm [shape: f32[416,128], index: 3, kind: output, shape index: {}]
  %s4 = sld [smem:[#allocation0]]
  $region61: #{tpu_custom_call.1} parent=0
    _
  %s6 = ssub.s32 1, %s4
  %s7 = scalar_select 0, %s6, %s4
  $region1: #{tpu_custom_call.1} parent=0
    #allocation2 [shape = 'u8[106496]{0}', space=vmem, size = 0x1a000, scoped, tag = 'input window, operand 0']
    #allocation3 [shape = 's32[2]{0}', space=sflag, size = 0x8, scoped, tag = 'scoped memory for tpu_custom_call.1']
    #allocation4 [shape = 's32[2]{0}', space=sflag, size = 0x8, scoped, tag = 'scoped memory for tpu_custom_call.1']
    #allocation5 [shape = 'u8[32768]{0}', space=vmem, size = 0x8000, scoped, tag = 'input window, operand 1, single buffered']
    #allocation6 [shape = 's32[1]{0}', space=sflag, size = 0x4, scoped, tag = 'scoped memory for tpu_custom_call.1']
    #allocation7 [shape = 'u8[212992]{0}', space=vmem, size = 0x34000, scoped, tag = 'output window, operand 0']
    %8 = vsyncpa [#allocation3], 0
    %s9 = scalar_lea.sflag [#allocation3], 1
    %10 = vsyncpa %s9, 0
    %11 = vsyncpa [#allocation6], 0
    %12 = vsyncpa [#allocation4], 0
    %s13 = scalar_lea.sflag [#allocation4], 1
    %14 = vsyncpa %s13, 0
    loop: start=0, step=1, limit=4
    $region2: #{tpu_custom_call.1} parent=1 // loop_pre_header
      _
    $region3: #{tpu_custom_call.1} parent=1 // loop_header
      %s16 = sphi 0, %s20
      %p17 = scmp.ge.s32.totalorder %s16, 4
      %s23 = sphi 0, %s42
      %s24 = sphi 0, %s38
      %s25 = sphi 0, %s34
      %s26 = sphi 0, %s23
      %s27 = sphi 0, %s24
      %s28 = sphi 0, %s25
      %s29 = sphi 0, %s26
      %s30 = sphi 0, %s27
      %s31 = sphi 0, %s28
      %s47 = sphi 0, %s49
      %s50 = sphi 0, %s47
      %s51 = sphi 0, %s50
      %s67 = sphi 0, %s51
      %s75 = sphi 0, %s77
      %s78 = sphi 0, %s75
      %s79 = sphi 0, %s78
      %s95 = sphi 0, %s79
      %s101 = sphi 0, %s103
      %s104 = sphi 0, %s101
      %s105 = sphi 0, %s104
      %s121 = sphi 0, %s105
      %s129 = sphi 0, %s131
      %s132 = sphi 0, %s129
      %s133 = sphi 0, %s132
      %s149 = sphi 0, %s133
    $region4: #{tpu_custom_call.1} parent=1 // loop_header_branch
      %19 = sbr.rel (%p17) target = $region8
    $region5: #{tpu_custom_call.1} parent=1 // loop_body
      %s21 = ssub.s32 %s16, 1
      %s22 = ssub.s32 %s16, 2
      %s32 = sadd.s32 1, %s25
      %p33 = scmp.ge.s32.totalorder %s32, 1
      %s34 = scalar_select %p33, 0, %s32
      %s35 = sadd.s32 1, %s24
      %s36 = scalar_select %p33, %s35, %s24
      %p37 = scmp.ge.s32.totalorder %s36, 1
      %s38 = scalar_select %p37, 0, %s36
      %s39 = sadd.s32 1, %s23
      %s40 = scalar_select %p37, %s39, %s23
      %p41 = scmp.ge.s32.totalorder %s40, 2
      %s42 = scalar_select %p41, 0, %s40
      %s43 = ssub.s32 %s23, %s42
      %s44 = ssub.s32 %s25, %s34
      %s45 = sor.u32 %s43, %s44
      %p46 = scmp.eq.s32.totalorder %s45, 0
      %s48 = sadd.s32 %s47, 1
      %s49 = scalar_select %p46, %s47, %s48
      %p52 = pneg %p46
      %p53 = scmp.eq.s32.totalorder %s16, 1
      %p54 = por %p52, %p53
      %p55 = scmp.ne.s32.totalorder %s47, %s50
      %p56 = scmp.eq.s32.totalorder %s16, 0
      %p57 = por %p55, %p56
      %p58 = scmp.ne.s32.totalorder %s47, %s50
      %p59 = scmp.eq.s32.totalorder %s21, 1
      %p60 = por %p58, %p59
      %p61 = scmp.ne.s32.totalorder %s50, %s51
      %p62 = scmp.eq.s32.totalorder %s21, 0
      %p63 = por %p61, %p62
      %p64 = scmp.ne.s32.totalorder %s50, %s51
      %p65 = scmp.eq.s32.totalorder %s22, 1
      %p66 = por %p64, %p65
      %p68 = scmp.ne.s32.totalorder %s51, %s67
      %p69 = scmp.eq.s32.totalorder %s22, 0
      %p70 = por %p68, %p69
      %s71 = ssub.s32 %s25, %s34
      %s72 = ssub.s32 %s24, %s38
      %s73 = sor.u32 %s71, %s72
      %p74 = scmp.eq.s32.totalorder %s73, 0
      %s76 = sadd.s32 %s75, 1
      %s77 = scalar_select %p74, %s75, %s76
      %p80 = pneg %p74
      %p81 = scmp.eq.s32.totalorder %s16, 1
      %p82 = por %p80, %p81
      %p83 = scmp.ne.s32.totalorder %s75, %s78
      %p84 = scmp.eq.s32.totalorder %s16, 0
      %p85 = por %p83, %p84
      %p86 = scmp.ne.s32.totalorder %s75, %s78
      %p87 = scmp.eq.s32.totalorder %s21, 1
      %p88 = por %p86, %p87
      %p89 = scmp.ne.s32.totalorder %s78, %s79
      %p90 = scmp.eq.s32.totalorder %s21, 0
      %p91 = por %p89, %p90
      %p92 = scmp.ne.s32.totalorder %s78, %s79
      %p93 = scmp.eq.s32.totalorder %s22, 1
      %p94 = por %p92, %p93
      %p96 = scmp.ne.s32.totalorder %s79, %s95
      %p97 = scmp.eq.s32.totalorder %s22, 0
      %p98 = por %p96, %p97
      %s99 = ssub.s32 %s24, %s38
      %p100 = scmp.eq.s32.totalorder %s99, 0
      %s102 = sadd.s32 %s101, 1
      %s103 = scalar_select %p100, %s101, %s102
      %p106 = pneg %p100
      %p107 = scmp.eq.s32.totalorder %s16, 1
      %p108 = por %p106, %p107
      %p109 = scmp.ne.s32.totalorder %s101, %s104
      %p110 = scmp.eq.s32.totalorder %s16, 0
      %p111 = por %p109, %p110
      %p112 = scmp.ne.s32.totalorder %s101, %s104
      %p113 = scmp.eq.s32.totalorder %s21, 1
      %p114 = por %p112, %p113
      %p115 = scmp.ne.s32.totalorder %s104, %s105
      %p116 = scmp.eq.s32.totalorder %s21, 0
      %p117 = por %p115, %p116
      %p118 = scmp.ne.s32.totalorder %s104, %s105
      %p119 = scmp.eq.s32.totalorder %s22, 1
      %p120 = por %p118, %p119
      %p122 = scmp.ne.s32.totalorder %s105, %s121
      %p123 = scmp.eq.s32.totalorder %s22, 0
      %p124 = por %p122, %p123
      %s125 = ssub.s32 %s23, %s42
      %s126 = ssub.s32 %s24, %s38
      %s127 = sor.u32 %s125, %s126
      %p128 = scmp.eq.s32.totalorder %s127, 0
      %s130 = sadd.s32 %s129, 1
      %s131 = scalar_select %p128, %s129, %s130
      %p134 = pneg %p128
      %p135 = scmp.eq.s32.totalorder %s16, 1
      %p136 = por %p134, %p135
      %p137 = scmp.ne.s32.totalorder %s129, %s132
      %p138 = scmp.eq.s32.totalorder %s16, 0
      %p139 = por %p137, %p138
      %p140 = scmp.ne.s32.totalorder %s129, %s132
      %p141 = scmp.eq.s32.totalorder %s21, 1
      %p142 = por %p140, %p141
      %p143 = scmp.ne.s32.totalorder %s132, %s133
      %p144 = scmp.eq.s32.totalorder %s21, 0
      %p145 = por %p143, %p144
      %p146 = scmp.ne.s32.totalorder %s132, %s133
      %p147 = scmp.eq.s32.totalorder %s22, 1
      %p148 = por %p146, %p147
      %p150 = scmp.ne.s32.totalorder %s133, %s149
      %p151 = scmp.eq.s32.totalorder %s22, 0
      %p152 = por %p150, %p151
      %p153 = scmp.le.s32.totalorder 1, %s16
      %p154 = scmp.lt.s32.totalorder %s16, 3
      %p155 = pnand %p153, %p154
      %p156 = pneg %p155
      // Predicated region
      $region9: #{tpu_custom_call.1} parent=5 // pred_check
        _
      $region10: #{tpu_custom_call.1} parent=5 // pred_check_branch
        %158 = sbr.rel (%p155) target = $region12
      $region11: #{tpu_custom_call.1} parent=5 // pred_region
        %s159 = ssub.s32 %s16, 1
        // Predicated region
        $region13: #{tpu_custom_call.1} parent=11 // pred_check
          %p160 = pneg %p91
        $region14: #{tpu_custom_call.1} parent=11 // pred_check_branch
          %162 = sbr.rel (%p160) target = $region16
        $region15: #{tpu_custom_call.1} parent=11 // pred_region
          %s163 = smul.u32 16, %s28
          %s165 = ssub.s32 1024, 1024
          %166 = vsyncadd [#allocation6], %s165
          %s167 = sadd.s32 %s27, %s163
          %s168 = smul.addr %s167, 64
          %s169 = scalar_lea.hbm %s1, %s168
          %s170 = sshll.u32 [#allocation5], 4
          %s171 = int_to_ptr.vmem [resolvable:$true] %s170
          %176 = dma.hbm_to_vmem [thread:$0]  %s169, 1024, %s171, [#allocation6], 64, 64, 4
        $region16: #{tpu_custom_call.1} parent=11 // pred_fallthru
          _
        // Predicated region
        $region17: #{tpu_custom_call.1} parent=11 // pred_check
          %p177 = pneg %p117
        $region18: #{tpu_custom_call.1} parent=11 // pred_check_branch
          %179 = sbr.rel (%p177) target = $region20
        $region19: #{tpu_custom_call.1} parent=11 // pred_region
          %p180 = scmp.lt.s32.totalorder %s27, 0
          %s181 = scalar_select %p180, %s27, 0
          %s182 = scalar_lea.vmem %s2, %s181
        $region20: #{tpu_custom_call.1} parent=11 // pred_fallthru
          _
      $region12: #{tpu_custom_call.1} parent=5 // pred_fallthru
        _
      %p183 = scmp.lt.s32.totalorder %s16, 2
      // Predicated region
      $region21: #{tpu_custom_call.1} parent=5 // pred_check
        %p184 = pneg %p183
      $region22: #{tpu_custom_call.1} parent=5 // pred_check_branch
        %186 = sbr.rel (%p184) target = $region24
      $region23: #{tpu_custom_call.1} parent=5 // pred_region
        // Predicated region
        $region25: #{tpu_custom_call.1} parent=23 // pred_check
          %p187 = pneg %p57
        $region26: #{tpu_custom_call.1} parent=23 // pred_check_branch
          %189 = sbr.rel (%p187) target = $region28
        $region27: #{tpu_custom_call.1} parent=23 // pred_region
          %s190 = sand.u32 %s47, 1
          %s191 = scalar_lea.sflag [#allocation3], %s190
          %s192 = sand.u32 %s47, 1
          %s193 = smul.addr %s192, 104
          %s194 = scalar_lea.vmem [#allocation2], %s193
          %s195 = smul.u32 26, %s23
          %s197 = ssub.s32 1664, 1664
          %198 = vsyncadd %s191, %s197
          %s199 = sadd.s32 %s25, %s195
          %s200 = smul.addr %s199, 64
          %s201 = scalar_lea.hbm %s0, %s200
          %s202 = sshll.u32 %s194, 4
          %s203 = int_to_ptr.vmem [resolvable:$true] %s202
          %208 = dma.hbm_to_vmem [thread:$0]  %s201, 1664, %s203, %s191, 64, 64, 4
        $region28: #{tpu_custom_call.1} parent=23 // pred_fallthru
          _
      $region24: #{tpu_custom_call.1} parent=5 // pred_fallthru
        _
      %p209 = scmp.le.s32.totalorder 1, %s16
      %p210 = scmp.lt.s32.totalorder %s16, 3
      %p211 = pnand %p209, %p210
      %p212 = pneg %p211
      // Predicated region
      $region29: #{tpu_custom_call.1} parent=5 // pred_check
        _
      $region30: #{tpu_custom_call.1} parent=5 // pred_check_branch
        %214 = sbr.rel (%p211) target = $region32
      $region31: #{tpu_custom_call.1} parent=5 // pred_region
        %s215 = ssub.s32 %s16, 1
        %s216 = sand.u32 %s50, 1
        %s217 = scalar_lea.sflag [#allocation3], %s216
        %s218 = sand.u32 %s50, 1
        %s219 = smul.addr %s218, 104
        %s220 = scalar_lea.vmem [#allocation2], %s219
        // Predicated region
        $region33: #{tpu_custom_call.1} parent=31 // pred_check
          %p221 = pneg %p63
        $region34: #{tpu_custom_call.1} parent=31 // pred_check_branch
          %223 = sbr.rel (%p221) target = $region36
        $region35: #{tpu_custom_call.1} parent=31 // pred_region
          %224 = dma.done %s217, 1664
        $region36: #{tpu_custom_call.1} parent=31 // pred_fallthru
          _
        // Predicated region
        $region37: #{tpu_custom_call.1} parent=31 // pred_check
          %p225 = pneg %p91
        $region38: #{tpu_custom_call.1} parent=31 // pred_check_branch
          %227 = sbr.rel (%p225) target = $region40
        $region39: #{tpu_custom_call.1} parent=31 // pred_region
          %228 = dma.done [#allocation6], 1024
        $region40: #{tpu_custom_call.1} parent=31 // pred_fallthru
          _
        %s229 = sand.u32 %s50, 1
        %s230 = scalar_lea.sflag [#allocation3], %s229
        %s231 = sand.u32 %s50, 1
        %s232 = smul.addr %s231, 104
        %s233 = scalar_lea.vmem [#allocation2], %s232
        %p234 = pneg %p63
        %p235 = pneg %p60
        %p236 = pneg %p91
        %p237 = pneg %p88
        %p238 = scmp.lt.s32.totalorder %s27, 0
        %s239 = scalar_select %p238, %s27, 0
        %s240 = scalar_lea.vmem %s2, %s239
        %p241 = pneg %p117
        %p242 = pneg %p114
        %p243 = pneg %p145
        %p244 = pneg %p142
        %s245 = sand.u32 %s132, 1
        %s246 = scalar_lea.sflag [#allocation4], %s245
        %s247 = sand.u32 %s132, 1
        %s248 = smul.addr %s247, 208
        %s249 = scalar_lea.vmem [#allocation7], %s248
        %s250 = smul.u32 26, %s26
        %s251 = smul.u32 16, %s28
        %p252 = scmp.lt.s32.totalorder %s27, 0
        %s253 = scalar_select %p252, %s27, 0
        %s254 = scalar_lea.vmem %s2, %s253
        %s255 = smul.u32 26, %s26
        %p257 = scmp.eq.s32.totalorder %s28, 0
        // Predicated region
        $region41: #{tpu_custom_call.1} parent=31 // pred_check
          %p258 = pneg %p257
        $region42: #{tpu_custom_call.1} parent=31 // pred_check_branch
          %260 = sbr.rel (%p258) target = $region44
        $region43: #{tpu_custom_call.1} parent=31 // pred_region
          %261 = vst [vmem:[%s249] sm:$0xff] 0.0
          %262 = vst [vmem:[%s249 + $0x8] sm:$0xff] 0.0
          %263 = vst [vmem:[%s249 + $0x10] sm:$0xff] 0.0
          %264 = vst [vmem:[%s249 + $0x18] sm:$0xff] 0.0
          %265 = vst [vmem:[%s249 + $0x20] sm:$0xff] 0.0
          %266 = vst [vmem:[%s249 + $0x28] sm:$0xff] 0.0
          %267 = vst [vmem:[%s249 + $0x30] sm:$0xff] 0.0
          %268 = vst [vmem:[%s249 + $0x38] sm:$0xff] 0.0
          %269 = vst [vmem:[%s249 + $0x40] sm:$0xff] 0.0
          %270 = vst [vmem:[%s249 + $0x48] sm:$0xff] 0.0
          %271 = vst [vmem:[%s249 + $0x50] sm:$0xff] 0.0
          %272 = vst [vmem:[%s249 + $0x58] sm:$0xff] 0.0
          %273 = vst [vmem:[%s249 + $0x60] sm:$0xff] 0.0
          %274 = vst [vmem:[%s249 + $0x68] sm:$0xff] 0.0
          %275 = vst [vmem:[%s249 + $0x70] sm:$0xff] 0.0
          %276 = vst [vmem:[%s249 + $0x78] sm:$0xff] 0.0
          %277 = vst [vmem:[%s249 + $0x80] sm:$0xff] 0.0
          %278 = vst [vmem:[%s249 + $0x88] sm:$0xff] 0.0
          %279 = vst [vmem:[%s249 + $0x90] sm:$0xff] 0.0
          %280 = vst [vmem:[%s249 + $0x98] sm:$0xff] 0.0
          %281 = vst [vmem:[%s249 + $0xa0] sm:$0xff] 0.0
          %282 = vst [vmem:[%s249 + $0xa8] sm:$0xff] 0.0
          %283 = vst [vmem:[%s249 + $0xb0] sm:$0xff] 0.0
          %284 = vst [vmem:[%s249 + $0xb8] sm:$0xff] 0.0
          %285 = vst [vmem:[%s249 + $0xc0] sm:$0xff] 0.0
          %286 = vst [vmem:[%s249 + $0xc8] sm:$0xff] 0.0
        $region44: #{tpu_custom_call.1} parent=31 // pred_fallthru
          _
        %v287 = vld [vmem:[%s249] sm:$0xff]
        %v288 = vld [vmem:[%s249 + $0x8] sm:$0xff]
        %v289 = vld [vmem:[%s249 + $0x10] sm:$0xff]
        %v290 = vld [vmem:[%s249 + $0x18] sm:$0xff]
        %v291 = vld [vmem:[%s249 + $0x20] sm:$0xff]
        %v292 = vld [vmem:[%s249 + $0x28] sm:$0xff]
        %v293 = vld [vmem:[%s249 + $0x30] sm:$0xff]
        %v294 = vld [vmem:[%s249 + $0x38] sm:$0xff]
        %v295 = vld [vmem:[%s249 + $0x40] sm:$0xff]
        %v296 = vld [vmem:[%s249 + $0x48] sm:$0xff]
        %v297 = vld [vmem:[%s249 + $0x50] sm:$0xff]
        %v298 = vld [vmem:[%s249 + $0x58] sm:$0xff]
        %v299 = vld [vmem:[%s249 + $0x60] sm:$0xff]
        %v300 = vld [vmem:[%s249 + $0x68] sm:$0xff]
        %v301 = vld [vmem:[%s249 + $0x70] sm:$0xff]
        %v302 = vld [vmem:[%s249 + $0x78] sm:$0xff]
        %v303 = vld [vmem:[%s249 + $0x80] sm:$0xff]
        %v304 = vld [vmem:[%s249 + $0x88] sm:$0xff]
        %v305 = vld [vmem:[%s249 + $0x90] sm:$0xff]
        %v306 = vld [vmem:[%s249 + $0x98] sm:$0xff]
        %v307 = vld [vmem:[%s249 + $0xa0] sm:$0xff]
        %v308 = vld [vmem:[%s249 + $0xa8] sm:$0xff]
        %v309 = vld [vmem:[%s249 + $0xb0] sm:$0xff]
        %v310 = vld [vmem:[%s249 + $0xb8] sm:$0xff]
        %v311 = vld [vmem:[%s249 + $0xc0] sm:$0xff]
        %v312 = vld [vmem:[%s249 + $0xc8] sm:$0xff]
        %v313 = vld [vmem:[%s220] sm:$0xf]
        %v314 = vld [vmem:[%s220 + $0x4] sm:$0xf]
        %v315 = vld [vmem:[%s220 + $0x8] sm:$0xf]
        %v316 = vld [vmem:[%s220 + $0xc] sm:$0xf]
        %v317 = vld [vmem:[%s220 + $0x10] sm:$0xf]
        %v318 = vld [vmem:[%s220 + $0x14] sm:$0xf]
        %v319 = vld [vmem:[%s220 + $0x18] sm:$0xf]
        %v320 = vld [vmem:[%s220 + $0x1c] sm:$0xf]
        %v321 = vld [vmem:[%s220 + $0x20] sm:$0xf]
        %v322 = vld [vmem:[%s220 + $0x24] sm:$0xf]
        %v323 = vld [vmem:[%s220 + $0x28] sm:$0xf]
        %v324 = vld [vmem:[%s220 + $0x2c] sm:$0xf]
        %v325 = vld [vmem:[%s220 + $0x30] sm:$0xf]
        %v326 = vld [vmem:[%s220 + $0x34] sm:$0xf]
        %v327 = vld [vmem:[%s220 + $0x38] sm:$0xf]
        %v328 = vld [vmem:[%s220 + $0x3c] sm:$0xf]
        %v329 = vld [vmem:[%s220 + $0x40] sm:$0xf]
        %v330 = vld [vmem:[%s220 + $0x44] sm:$0xf]
        %v331 = vld [vmem:[%s220 + $0x48] sm:$0xf]
        %v332 = vld [vmem:[%s220 + $0x4c] sm:$0xf]
        %v333 = vld [vmem:[%s220 + $0x50] sm:$0xf]
        %v334 = vld [vmem:[%s220 + $0x54] sm:$0xf]
        %v335 = vld [vmem:[%s220 + $0x58] sm:$0xf]
        %v336 = vld [vmem:[%s220 + $0x5c] sm:$0xf]
        %v337 = vld [vmem:[%s220 + $0x60] sm:$0xf]
        %v338 = vld [vmem:[%s220 + $0x64] sm:$0xf]
        %v339 = vld [vmem:[#allocation5] sm:$0xf]
        %v340 = vld [vmem:[#allocation5 + $0x4] sm:$0xf]
        %v341 = vld [vmem:[#allocation5 + $0x8] sm:$0xf]
        %v342 = vld [vmem:[#allocation5 + $0xc] sm:$0xf]
        %v343 = vld [vmem:[#allocation5 + $0x10] sm:$0xf]
        %v344 = vld [vmem:[#allocation5 + $0x14] sm:$0xf]
        %v345 = vld [vmem:[#allocation5 + $0x18] sm:$0xf]
        %v346 = vld [vmem:[#allocation5 + $0x1c] sm:$0xf]
        %v347 = vld [vmem:[#allocation5 + $0x20] sm:$0xf]
        %v348 = vld [vmem:[#allocation5 + $0x24] sm:$0xf]
        %v349 = vld [vmem:[#allocation5 + $0x28] sm:$0xf]
        %v350 = vld [vmem:[#allocation5 + $0x2c] sm:$0xf]
        %v351 = vld [vmem:[#allocation5 + $0x30] sm:$0xf]
        %v352 = vld [vmem:[#allocation5 + $0x34] sm:$0xf]
        %v353 = vld [vmem:[#allocation5 + $0x38] sm:$0xf]
        %v354 = vld [vmem:[#allocation5 + $0x3c] sm:$0xf]
        %v381 = vunpack.c.l.b16 %v313
        %v382 = vunpack.c.l.b16 %v314
        %v383 = vunpack.c.l.b16 %v315
        %v384 = vunpack.c.l.b16 %v316
        %v385 = vunpack.c.l.b16 %v317
        %v386 = vunpack.c.l.b16 %v318
        %v387 = vunpack.c.l.b16 %v319
        %v388 = vunpack.c.l.b16 %v320
        %v389 = vunpack.c.l.b16 %v321
        %v390 = vunpack.c.l.b16 %v322
        %v391 = vunpack.c.l.b16 %v323
        %v392 = vunpack.c.l.b16 %v324
        %v393 = vunpack.c.l.b16 %v325
        %v394 = vunpack.c.l.b16 %v326
        %v395 = vunpack.c.l.b16 %v327
        %v396 = vunpack.c.l.b16 %v328
        %v397 = vunpack.c.l.b16 %v329
        %v398 = vunpack.c.l.b16 %v330
        %v399 = vunpack.c.l.b16 %v331
        %v400 = vunpack.c.l.b16 %v332
        %v401 = vunpack.c.l.b16 %v333
        %v402 = vunpack.c.l.b16 %v334
        %v403 = vunpack.c.l.b16 %v335
        %v404 = vunpack.c.l.b16 %v336
        %v405 = vunpack.c.l.b16 %v337
        %v406 = vunpack.c.l.b16 %v338
        %v407 = vpack.c.b16 %v382, %v381
        %v408 = vpack.c.b16 %v384, %v383
        %v409 = vpack.c.b16 %v386, %v385
        %v410 = vpack.c.b16 %v388, %v387
        %v411 = vpack.c.b16 %v390, %v389
        %v412 = vpack.c.b16 %v392, %v391
        %v413 = vpack.c.b16 %v394, %v393
        %v414 = vpack.c.b16 %v396, %v395
        %v415 = vpack.c.b16 %v398, %v397
        %v416 = vpack.c.b16 %v400, %v399
        %v417 = vpack.c.b16 %v402, %v401
        %v418 = vpack.c.b16 %v404, %v403
        %v419 = vpack.c.b16 %v406, %v405
        %v449 = vunpack.c.l.b16 %v339
        %v450 = vunpack.c.l.b16 %v340
        %v451 = vunpack.c.l.b16 %v341
        %v452 = vunpack.c.l.b16 %v342
        %v453 = vunpack.c.l.b16 %v343
        %v454 = vunpack.c.l.b16 %v344
        %v455 = vunpack.c.l.b16 %v345
        %v456 = vunpack.c.l.b16 %v346
        %v457 = vunpack.c.l.b16 %v347
        %v458 = vunpack.c.l.b16 %v348
        %v459 = vunpack.c.l.b16 %v349
        %v460 = vunpack.c.l.b16 %v350
        %v461 = vunpack.c.l.b16 %v351
        %v462 = vunpack.c.l.b16 %v352
        %v463 = vunpack.c.l.b16 %v353
        %v464 = vunpack.c.l.b16 %v354
        %v465 = vpack.c.b16 %v450, %v449
        %v466 = vpack.c.b16 %v452, %v451
        %v467 = vpack.c.b16 %v454, %v453
        %v468 = vpack.c.b16 %v456, %v455
        %v469 = vpack.c.b16 %v458, %v457
        %v470 = vpack.c.b16 %v460, %v459
        %v471 = vpack.c.b16 %v462, %v461
        %v472 = vpack.c.b16 %v464, %v463
        %481 = vmatprep.subr.bf16.mxu0 0
        %482 = vmatpush1.bf16.msra.mxu0 %v465
        %483 = vmatprep.subr.bf16.mxu0 0
        %484 = vmatpush1.bf16.msra.mxu0 %v466
        %485 = vmatprep.subr.bf16.mxu0 0
        %486 = vmatpush1.bf16.msra.mxu0 %v467
        %487 = vmatprep.subr.bf16.mxu0 0
        %488 = vmatpush1.bf16.msra.mxu0 %v468
        %489 = vmatprep.subr.bf16.mxu0 0
        %490 = vmatpush1.bf16.msra.mxu0 %v469
        %491 = vmatprep.subr.bf16.mxu0 0
        %492 = vmatpush1.bf16.msra.mxu0 %v470
        %493 = vmatprep.subr.bf16.mxu0 0
        %494 = vmatpush1.bf16.msra.mxu0 %v471
        %495 = vmatprep.subr.bf16.mxu0 0
        %496 = vmatpush1.bf16.msra.mxu0 %v472
        %497 = vmatprep.subr.bf16.mxu0 0
        %498 = vmatpush1.bf16.msra.mxu0 0
        %499 = vmatprep.subr.bf16.mxu0 0
        %500 = vmatpush1.bf16.msra.mxu0 0
        %501 = vmatprep.subr.bf16.mxu0 0
        %502 = vmatpush1.bf16.msra.mxu0 0
        %503 = vmatprep.subr.bf16.mxu0 0
        %504 = vmatpush1.bf16.msra.mxu0 0
        %505 = vmatprep.subr.bf16.mxu0 0
        %506 = vmatpush1.bf16.msra.mxu0 0
        %507 = vmatprep.subr.bf16.mxu0 0
        %508 = vmatpush1.bf16.msra.mxu0 0
        %509 = vmatprep.subr.bf16.mxu0 0
        %510 = vmatpush1.bf16.msra.mxu0 0
        %511 = vmatprep.subr.bf16.mxu0 0
        %512 = vmatpush1.bf16.msra.mxu0 0
        %513 = vmatprep.mubr.bf16.mxu0 0
        %514 = vmatmul.mubr.bf16.gmra.mrb[0].mxu0 %v407
        %v515 = vpop.f32.mrb[0].mxu0
        %v516 = vadd.f32 0.0, %v515
        %v517 = vpop.f32.mrb[0].mxu0
        %v518 = vpop.f32.mrb[0].mxu0
        %v519 = vadd.f32 0.0, %v518
        %v520 = vpop.f32.mrb[0].mxu0
        %521 = vmatprep.mubr.bf16.mxu0 0
        %522 = vmatmul.mubr.bf16.gmra.mrb[0].mxu0 %v408
        %v523 = vpop.f32.mrb[0].mxu0
        %v524 = vadd.f32 0.0, %v523
        %v525 = vpop.f32.mrb[0].mxu0
        %v526 = vpop.f32.mrb[0].mxu0
        %v527 = vadd.f32 0.0, %v526
        %v528 = vpop.f32.mrb[0].mxu0
        %529 = vmatprep.mubr.bf16.mxu0 0
        %530 = vmatmul.mubr.bf16.gmra.mrb[0].mxu0 %v409
        %v531 = vpop.f32.mrb[0].mxu0
        %v532 = vadd.f32 0.0, %v531
        %v533 = vpop.f32.mrb[0].mxu0
        %v534 = vpop.f32.mrb[0].mxu0
        %v535 = vadd.f32 0.0, %v534
        %v536 = vpop.f32.mrb[0].mxu0
        %537 = vmatprep.mubr.bf16.mxu0 0
        %538 = vmatmul.mubr.bf16.gmra.mrb[0].mxu0 %v410
        %v539 = vpop.f32.mrb[0].mxu0
        %v540 = vadd.f32 0.0, %v539
        %v541 = vpop.f32.mrb[0].mxu0
        %v542 = vpop.f32.mrb[0].mxu0
        %v543 = vadd.f32 0.0, %v542
        %v544 = vpop.f32.mrb[0].mxu0
        %545 = vmatprep.mubr.bf16.mxu0 0
        %546 = vmatmul.mubr.bf16.gmra.mrb[0].mxu0 %v411
        %v547 = vpop.f32.mrb[0].mxu0
        %v548 = vadd.f32 0.0, %v547
        %v549 = vpop.f32.mrb[0].mxu0
        %v550 = vpop.f32.mrb[0].mxu0
        %v551 = vadd.f32 0.0, %v550
        %v552 = vpop.f32.mrb[0].mxu0
        %553 = vmatprep.mubr.bf16.mxu0 0
        %554 = vmatmul.mubr.bf16.gmra.mrb[0].mxu0 %v412
        %v555 = vpop.f32.mrb[0].mxu0
        %v556 = vadd.f32 0.0, %v555
        %v557 = vpop.f32.mrb[0].mxu0
        %v558 = vpop.f32.mrb[0].mxu0
        %v559 = vadd.f32 0.0, %v558
        %v560 = vpop.f32.mrb[0].mxu0
        %561 = vmatprep.mubr.bf16.mxu0 0
        %562 = vmatmul.mubr.bf16.gmra.mrb[0].mxu0 %v413
        %v563 = vpop.f32.mrb[0].mxu0
        %v564 = vadd.f32 0.0, %v563
        %v565 = vpop.f32.mrb[0].mxu0
        %v566 = vpop.f32.mrb[0].mxu0
        %v567 = vadd.f32 0.0, %v566
        %v568 = vpop.f32.mrb[0].mxu0
        %569 = vmatprep.mubr.bf16.mxu0 0
        %570 = vmatmul.mubr.bf16.gmra.mrb[0].mxu0 %v414
        %v571 = vpop.f32.mrb[0].mxu0
        %v572 = vadd.f32 0.0, %v571
        %v573 = vpop.f32.mrb[0].mxu0
        %v574 = vpop.f32.mrb[0].mxu0
        %v575 = vadd.f32 0.0, %v574
        %v576 = vpop.f32.mrb[0].mxu0
        %577 = vmatprep.mubr.bf16.mxu0 0
        %578 = vmatmul.mubr.bf16.gmra.mrb[0].mxu0 %v415
        %v579 = vpop.f32.mrb[0].mxu0
        %v580 = vadd.f32 0.0, %v579
        %v581 = vpop.f32.mrb[0].mxu0
        %v582 = vpop.f32.mrb[0].mxu0
        %v583 = vadd.f32 0.0, %v582
        %v584 = vpop.f32.mrb[0].mxu0
        %585 = vmatprep.mubr.bf16.mxu0 0
        %586 = vmatmul.mubr.bf16.gmra.mrb[0].mxu0 %v416
        %v587 = vpop.f32.mrb[0].mxu0
        %v588 = vadd.f32 0.0, %v587
        %v589 = vpop.f32.mrb[0].mxu0
        %v590 = vpop.f32.mrb[0].mxu0
        %v591 = vadd.f32 0.0, %v590
        %v592 = vpop.f32.mrb[0].mxu0
        %593 = vmatprep.mubr.bf16.mxu0 0
        %594 = vmatmul.mubr.bf16.gmra.mrb[0].mxu0 %v417
        %v595 = vpop.f32.mrb[0].mxu0
        %v596 = vadd.f32 0.0, %v595
        %v597 = vpop.f32.mrb[0].mxu0
        %v598 = vpop.f32.mrb[0].mxu0
        %v599 = vadd.f32 0.0, %v598
        %v600 = vpop.f32.mrb[0].mxu0
        %601 = vmatprep.mubr.bf16.mxu0 0
        %602 = vmatmul.mubr.bf16.gmra.mrb[0].mxu0 %v418
        %v603 = vpop.f32.mrb[0].mxu0
        %v604 = vadd.f32 0.0, %v603
        %v605 = vpop.f32.mrb[0].mxu0
        %v606 = vpop.f32.mrb[0].mxu0
        %v607 = vadd.f32 0.0, %v606
        %v608 = vpop.f32.mrb[0].mxu0
        %609 = vmatprep.mubr.bf16.mxu0 0
        %610 = vmatmul.mubr.bf16.gmra.mrb[0].mxu0 %v419
        %v611 = vpop.f32.mrb[0].mxu0
        %v612 = vadd.f32 0.0, %v611
        %v613 = vpop.f32.mrb[0].mxu0
        %v614 = vpop.f32.mrb[0].mxu0
        %v615 = vadd.f32 0.0, %v614
        %v616 = vpop.f32.mrb[0].mxu0
        %617 = vdwg.mxu0
        %v618 = vadd.f32 %v287, %v516
        %v619 = vadd.f32 %v288, %v519
        %v620 = vadd.f32 %v289, %v524
        %v621 = vadd.f32 %v290, %v527
        %v622 = vadd.f32 %v291, %v532
        %v623 = vadd.f32 %v292, %v535
        %v624 = vadd.f32 %v293, %v540
        %v625 = vadd.f32 %v294, %v543
        %v626 = vadd.f32 %v295, %v548
        %v627 = vadd.f32 %v296, %v551
        %v628 = vadd.f32 %v297, %v556
        %v629 = vadd.f32 %v298, %v559
        %v630 = vadd.f32 %v299, %v564
        %v631 = vadd.f32 %v300, %v567
        %v632 = vadd.f32 %v301, %v572
        %v633 = vadd.f32 %v302, %v575
        %v634 = vadd.f32 %v303, %v580
        %v635 = vadd.f32 %v304, %v583
        %v636 = vadd.f32 %v305, %v588
        %v637 = vadd.f32 %v306, %v591
        %v638 = vadd.f32 %v307, %v596
        %v639 = vadd.f32 %v308, %v599
        %v640 = vadd.f32 %v309, %v604
        %v641 = vadd.f32 %v310, %v607
        %v642 = vadd.f32 %v311, %v612
        %v643 = vadd.f32 %v312, %v615
        %644 = vst [vmem:[%s249] sm:$0xff] %v618
        %645 = vst [vmem:[%s249 + $0x8] sm:$0xff] %v619
        %646 = vst [vmem:[%s249 + $0x10] sm:$0xff] %v620
        %647 = vst [vmem:[%s249 + $0x18] sm:$0xff] %v621
        %648 = vst [vmem:[%s249 + $0x20] sm:$0xff] %v622
        %649 = vst [vmem:[%s249 + $0x28] sm:$0xff] %v623
        %650 = vst [vmem:[%s249 + $0x30] sm:$0xff] %v624
        %651 = vst [vmem:[%s249 + $0x38] sm:$0xff] %v625
        %652 = vst [vmem:[%s249 + $0x40] sm:$0xff] %v626
        %653 = vst [vmem:[%s249 + $0x48] sm:$0xff] %v627
        %654 = vst [vmem:[%s249 + $0x50] sm:$0xff] %v628
        %655 = vst [vmem:[%s249 + $0x58] sm:$0xff] %v629
        %656 = vst [vmem:[%s249 + $0x60] sm:$0xff] %v630
        %657 = vst [vmem:[%s249 + $0x68] sm:$0xff] %v631
        %658 = vst [vmem:[%s249 + $0x70] sm:$0xff] %v632
        %659 = vst [vmem:[%s249 + $0x78] sm:$0xff] %v633
        %660 = vst [vmem:[%s249 + $0x80] sm:$0xff] %v634
        %661 = vst [vmem:[%s249 + $0x88] sm:$0xff] %v635
        %662 = vst [vmem:[%s249 + $0x90] sm:$0xff] %v636
        %663 = vst [vmem:[%s249 + $0x98] sm:$0xff] %v637
        %664 = vst [vmem:[%s249 + $0xa0] sm:$0xff] %v638
        %665 = vst [vmem:[%s249 + $0xa8] sm:$0xff] %v639
        %666 = vst [vmem:[%s249 + $0xb0] sm:$0xff] %v640
        %667 = vst [vmem:[%s249 + $0xb8] sm:$0xff] %v641
        %668 = vst [vmem:[%s249 + $0xc0] sm:$0xff] %v642
        %669 = vst [vmem:[%s249 + $0xc8] sm:$0xff] %v643
        // Predicated region
        $region45: #{tpu_custom_call.1} parent=31 // pred_check
          %p670 = pneg %p257
        $region46: #{tpu_custom_call.1} parent=31 // pred_check_branch
          %672 = sbr.rel (%p670) target = $region48
        $region47: #{tpu_custom_call.1} parent=31 // pred_region
          %v673 = vld [vmem:[%s249] sm:$0xff]
          %v674 = vld [vmem:[%s249 + $0x8] sm:$0xff]
          %v675 = vld [vmem:[%s249 + $0x10] sm:$0xff]
          %v676 = vld [vmem:[%s249 + $0x18] sm:$0xff]
          %v677 = vld [vmem:[%s249 + $0x20] sm:$0xff]
          %v678 = vld [vmem:[%s249 + $0x28] sm:$0xff]
          %v679 = vld [vmem:[%s249 + $0x30] sm:$0xff]
          %v680 = vld [vmem:[%s249 + $0x38] sm:$0xff]
          %v681 = vld [vmem:[%s249 + $0x40] sm:$0xff]
          %v682 = vld [vmem:[%s249 + $0x48] sm:$0xff]
          %v683 = vld [vmem:[%s249 + $0x50] sm:$0xff]
          %v684 = vld [vmem:[%s249 + $0x58] sm:$0xff]
          %v685 = vld [vmem:[%s249 + $0x60] sm:$0xff]
          %v686 = vld [vmem:[%s249 + $0x68] sm:$0xff]
          %v687 = vld [vmem:[%s249 + $0x70] sm:$0xff]
          %v688 = vld [vmem:[%s249 + $0x78] sm:$0xff]
          %v689 = vld [vmem:[%s249 + $0x80] sm:$0xff]
          %v690 = vld [vmem:[%s249 + $0x88] sm:$0xff]
          %v691 = vld [vmem:[%s249 + $0x90] sm:$0xff]
          %v692 = vld [vmem:[%s249 + $0x98] sm:$0xff]
          %v693 = vld [vmem:[%s249 + $0xa0] sm:$0xff]
          %v694 = vld [vmem:[%s249 + $0xa8] sm:$0xff]
          %v695 = vld [vmem:[%s249 + $0xb0] sm:$0xff]
          %v696 = vld [vmem:[%s249 + $0xb8] sm:$0xff]
          %v697 = vld [vmem:[%s249 + $0xc0] sm:$0xff]
          %v698 = vld [vmem:[%s249 + $0xc8] sm:$0xff]
          %v699 = vld [vmem:[%s254] sm:$0x1]
          %v701 = vlaneseq
          %v702 = vshrl.u32 %v701, 7
          %v703 = vsub.s32 0, %v702
          %v704 = vrot.slane %v699, %v703
          %v706 = vadd.f32 %v673, %v704
          %v707 = vadd.f32 %v674, %v704
          %v708 = vadd.f32 %v675, %v704
          %v709 = vadd.f32 %v676, %v704
          %v710 = vadd.f32 %v677, %v704
          %v711 = vadd.f32 %v678, %v704
          %v712 = vadd.f32 %v679, %v704
          %v713 = vadd.f32 %v680, %v704
          %v714 = vadd.f32 %v681, %v704
          %v715 = vadd.f32 %v682, %v704
          %v716 = vadd.f32 %v683, %v704
          %v717 = vadd.f32 %v684, %v704
          %v718 = vadd.f32 %v685, %v704
          %v719 = vadd.f32 %v686, %v704
          %v720 = vadd.f32 %v687, %v704
          %v721 = vadd.f32 %v688, %v704
          %v722 = vadd.f32 %v689, %v704
          %v723 = vadd.f32 %v690, %v704
          %v724 = vadd.f32 %v691, %v704
          %v725 = vadd.f32 %v692, %v704
          %v726 = vadd.f32 %v693, %v704
          %v727 = vadd.f32 %v694, %v704
          %v728 = vadd.f32 %v695, %v704
          %v729 = vadd.f32 %v696, %v704
          %v730 = vadd.f32 %v697, %v704
          %v731 = vadd.f32 %v698, %v704
          %732 = vst [vmem:[%s249] sm:$0xff] %v706
          %733 = vst [vmem:[%s249 + $0x8] sm:$0xff] %v707
          %734 = vst [vmem:[%s249 + $0x10] sm:$0xff] %v708
          %735 = vst [vmem:[%s249 + $0x18] sm:$0xff] %v709
          %736 = vst [vmem:[%s249 + $0x20] sm:$0xff] %v710
          %737 = vst [vmem:[%s249 + $0x28] sm:$0xff] %v711
          %738 = vst [vmem:[%s249 + $0x30] sm:$0xff] %v712
          %739 = vst [vmem:[%s249 + $0x38] sm:$0xff] %v713
          %740 = vst [vmem:[%s249 + $0x40] sm:$0xff] %v714
          %741 = vst [vmem:[%s249 + $0x48] sm:$0xff] %v715
          %742 = vst [vmem:[%s249 + $0x50] sm:$0xff] %v716
          %743 = vst [vmem:[%s249 + $0x58] sm:$0xff] %v717
          %744 = vst [vmem:[%s249 + $0x60] sm:$0xff] %v718
          %745 = vst [vmem:[%s249 + $0x68] sm:$0xff] %v719
          %746 = vst [vmem:[%s249 + $0x70] sm:$0xff] %v720
          %747 = vst [vmem:[%s249 + $0x78] sm:$0xff] %v721
          %748 = vst [vmem:[%s249 + $0x80] sm:$0xff] %v722
          %749 = vst [vmem:[%s249 + $0x88] sm:$0xff] %v723
          %750 = vst [vmem:[%s249 + $0x90] sm:$0xff] %v724
          %751 = vst [vmem:[%s249 + $0x98] sm:$0xff] %v725
          %752 = vst [vmem:[%s249 + $0xa0] sm:$0xff] %v726
          %753 = vst [vmem:[%s249 + $0xa8] sm:$0xff] %v727
          %754 = vst [vmem:[%s249 + $0xb0] sm:$0xff] %v728
          %755 = vst [vmem:[%s249 + $0xb8] sm:$0xff] %v729
          %756 = vst [vmem:[%s249 + $0xc0] sm:$0xff] %v730
          %757 = vst [vmem:[%s249 + $0xc8] sm:$0xff] %v731
        $region48: #{tpu_custom_call.1} parent=31 // pred_fallthru
          _
        %s758 = sand.u32 %s132, 1
        %s759 = scalar_lea.sflag [#allocation4], %s758
        %s760 = sand.u32 %s132, 1
        %s761 = smul.addr %s760, 208
        %s762 = scalar_lea.vmem [#allocation7], %s761
        // Predicated region
        $region49: #{tpu_custom_call.1} parent=31 // pred_check
          %p763 = pneg %p142
        $region50: #{tpu_custom_call.1} parent=31 // pred_check_branch
          %765 = sbr.rel (%p763) target = $region52
        $region51: #{tpu_custom_call.1} parent=31 // pred_region
          %s766 = smul.u32 26, %s26
          %s768 = ssub.s32 3328, 3328
          %769 = vsyncadd %s759, %s768
          %s770 = sadd.s32 %s27, %s766
          %s771 = smul.addr %s770, 128
          %s772 = scalar_lea.hbm %s3, %s771
          %s773 = sshll.u32 %s762, 4
          %s774 = int_to_ptr.vmem [resolvable:$true] %s773
          %779 = dma.vmem_to_hbm [thread:$0]  %s774, 3328, %s772, %s759, 128, 128, 8
        $region52: #{tpu_custom_call.1} parent=31 // pred_fallthru
          _
      $region32: #{tpu_custom_call.1} parent=5 // pred_fallthru
        _
      %p780 = scmp.le.s32.totalorder 2, %s16
      // Predicated region
      $region53: #{tpu_custom_call.1} parent=5 // pred_check
        %p781 = pneg %p780
      $region54: #{tpu_custom_call.1} parent=5 // pred_check_branch
        %783 = sbr.rel (%p781) target = $region56
      $region55: #{tpu_custom_call.1} parent=5 // pred_region
        %s784 = ssub.s32 %s16, 2
        // Predicated region
        $region57: #{tpu_custom_call.1} parent=55 // pred_check
          %p785 = pneg %p148
        $region58: #{tpu_custom_call.1} parent=55 // pred_check_branch
          %787 = sbr.rel (%p785) target = $region60
        $region59: #{tpu_custom_call.1} parent=55 // pred_region
          %s788 = sand.u32 %s133, 1
          %s789 = scalar_lea.sflag [#allocation4], %s788
          %s790 = sand.u32 %s133, 1
          %s791 = smul.addr %s790, 208
          %s792 = scalar_lea.vmem [#allocation7], %s791
          %793 = dma.done %s789, 3328
        $region60: #{tpu_custom_call.1} parent=55 // pred_fallthru
          _
      $region56: #{tpu_custom_call.1} parent=5 // pred_fallthru
        _
    $region6: #{tpu_custom_call.1} parent=1 // loop_footer
      %s20 = sadd.s32 1, %s16
    $region7: #{tpu_custom_call.1} parent=1 // loop_footer_branch
      %15 = sbr.rel target = $region3
    $region8: #{tpu_custom_call.1} parent=1 // loop_exit
      _
    %794 = vsyncpa [#allocation3], 1
    %s795 = scalar_lea.sflag [#allocation3], 1
    %796 = vsyncpa %s795, 1
    %797 = vsyncpa [#allocation6], 1
    %798 = vsyncpa [#allocation4], 1
    %s799 = scalar_lea.sflag [#allocation4], 1
    %800 = vsyncpa %s799, 1

</llo_original>
